<compile_context>
chip_gen: v5e
topology: v5e:2x2
jax: 0.10.0
libtpu: 0.0.40
codegen_flags: <defaults>
</compile_context>

<pallas_src>
import functools

import jax
import jax.numpy as jnp
from jax import lax
from jax.experimental import pallas as pl
from jax.experimental.pallas import tpu as pltpu

_SUBLANES = 8
_DEFAULT_BLOCK_BYTES = 4 * 1024 * 1024  # ~4 MiB per input block (f32)


def _ceil_div(a, b):
    return -(-a // b)


def _choose_tiling(H, W, itemsize, target_block_bytes):
    """Pick (TH, nsplit, tiles_per_split) for (1, TH, W) input blocks.

    - If a whole image fits in the byte budget, use one full-image block.
    - Otherwise TH is a multiple of 8 sized to ~target_block_bytes.
    - If the resulting block count is even, split it 2-way on a parallel grid
      axis (feeds both v7x TensorCores even at B=1); otherwise keep 1 split
      so every grid step maps to an in-bounds block (no OOB DMA).
    """
    full_bytes = H * W * itemsize
    if full_bytes <= target_block_bytes or H <= _SUBLANES:
        return H, 1, 1
    th = max(_SUBLANES,
             (target_block_bytes // (W * itemsize)) // _SUBLANES * _SUBLANES)
    if th >= H:
        return H, 1, 1
    nblocks = _ceil_div(H, th)
    if nblocks % 2 == 0:
        return th, 2, nblocks // 2
    return th, 1, nblocks


def _make_kernel(H, TH, tiles_per_split, need_mask):
    """Builds the per-block kernel (all tiling parameters are static)."""

    def kernel(pred_ref, targ_ref, mask_ref, loss_ref, m_ref):
        t = pl.program_id(2)

        @pl.when(t == 0)
        def _():
            loss_ref[...] = jnp.zeros_like(loss_ref)
            m_ref[...] = jnp.zeros_like(m_ref)

        p = pred_ref[0].astype(jnp.float32)   # (TH, W)
        g = targ_ref[0].astype(jnp.float32)
        m = mask_ref[0].astype(jnp.float32)

        r = p - g
        if need_mask:
            # Rows at/after H in the (partial) last block contain undefined
            # data.  Zero them with a select (NaN-safe) on BOTH the residual
            # and the mask so the loss sum and M = sum(mask) stay exact.
            row_start = (pl.program_id(1) * tiles_per_split + t) * TH
            rows = lax.broadcasted_iota(jnp.int32, (TH, 1), 0) + row_start
            valid = rows < H
            m = jnp.where(valid, m, 0.0)
            r = jnp.where(valid, r, 0.0)

        sq = m * r * r

        # Reduce only over the sublane (H) axis of the block: cross-vreg adds
        # (VALU) + a single intra-vreg sublane reduce, no reshape/relayout.
        loss_part = jnp.sum(sq, axis=0, keepdims=True)   # (1, W)
        m_part = jnp.sum(m, axis=0, keepdims=True)       # (1, W)

        loss_ref[...] += loss_part[None, None]            # (1, 1, 1, W)
        m_ref[...] += m_part[None, None]

    return kernel


@functools.partial(jax.jit, static_argnames=("reduction", "target_block_bytes"))
def mse_loss_pallas(prediction, target, mask, reduction="batch-based",
                    target_block_bytes=_DEFAULT_BLOCK_BYTES):
    B, H, W = prediction.shape

    if not jnp.issubdtype(mask.dtype, jnp.floating):
        # TODO(synk): prefer producer-side dtype (bf16/f32 mask); this cast only
        # covers bool/int masks and adds an extra pass for them.
        mask = mask.astype(prediction.dtype)

    itemsize = max(prediction.dtype.itemsize, target.dtype.itemsize,
                   mask.dtype.itemsize)
    TH, nsplit, tiles_per_split = _choose_tiling(H, W, itemsize,
                                                 target_block_bytes)
    need_mask = (nsplit * tiles_per_split * TH) > H

    grid = (B, nsplit, tiles_per_split)
    in_spec = pl.BlockSpec((1, TH, W),
                           lambda b, s, t: (b, s * tiles_per_split + t, 0))
    out_spec = pl.BlockSpec((1, 1, 1, W), lambda b, s, t: (b, s, 0, 0))

    bytes_accessed = (prediction.size * prediction.dtype.itemsize
                      + target.size * target.dtype.itemsize
                      + mask.size * mask.dtype.itemsize
                      + 2 * B * nsplit * W * 4)

    loss_acc, m_acc = pl.pallas_call(
        _make_kernel(H, TH, tiles_per_split, need_mask),
        out_shape=(
            jax.ShapeDtypeStruct((B, nsplit, 1, W), jnp.float32),
            jax.ShapeDtypeStruct((B, nsplit, 1, W), jnp.float32),
        ),
        grid_spec=pltpu.PrefetchScalarGridSpec(
            num_scalar_prefetch=0,
            grid=grid,
            in_specs=[in_spec, in_spec, in_spec],
            out_specs=[out_spec, out_spec],
        ),
        compiler_params=pltpu.CompilerParams(
            # b and split axes are independent (megacore-shardable); the H-tile
            # axis carries the resident accumulators.
            dimension_semantics=("parallel", "parallel", "arbitrary"),
            # 3 inputs x 2 buffers x <=4 MiB + tiny accumulators (~25 MiB);
            # explicit limit covers v5e's 16 MiB scoped default and leaves
            # headroom under v7x's 64 MiB physical VMEM.
            vmem_limit_bytes=48 * 1024 * 1024,
        ),
        cost_estimate=pl.CostEstimate(
            flops=5 * B * H * W, transcendentals=0,
            bytes_accessed=bytes_accessed),
    )(prediction, target, mask)

    # Final cross-lane reduce, once, outside the hot loop (O(B * nsplit * W)).
    image_loss = jnp.sum(loss_acc, axis=(1, 2, 3))   # sum_{h,w} mask * res^2
    M = jnp.sum(m_acc, axis=(1, 2, 3))               # sum_{h,w} mask
    M2 = 2.0 * M

    valid = M2 > 0
    any_valid = jnp.any(valid)

    if reduction == "batch-based":
        num = jnp.sum(jnp.where(valid, image_loss, 0.0))
        den = jnp.sum(jnp.where(valid, M2, 0.0))
        safe_den = jnp.where(den > 0, den, 1.0)
        return jnp.where(any_valid, num / safe_den, jnp.float32(0.0))
    else:  # image-based
        safe_M2 = jnp.where(valid, M2, 1.0)
        per_image = jnp.where(valid, image_loss / safe_M2, 0.0)
        count = jnp.sum(valid.astype(jnp.float32))
        safe_count = jnp.where(count > 0, count, 1.0)
        return jnp.where(any_valid, jnp.sum(per_image) / safe_count,
                         jnp.float32(0.0))


def _mse_loss_ref(prediction, target, mask, reduction="batch-based"):
    """Pure-JAX reference mirroring the PyTorch semantics."""
    M = jnp.sum(mask, axis=(1, 2))
    res = prediction - target
    image_loss = jnp.sum(mask * res * res, axis=(1, 2))
    M2 = 2.0 * M
    valid = M2 > 0
    if reduction == "batch-based":
        num = jnp.sum(jnp.where(valid, image_loss, 0.0))
        den = jnp.sum(jnp.where(valid, M2, 0.0))
        return jnp.where(jnp.any(valid), num / jnp.where(den > 0, den, 1.0),
                         jnp.float32(0.0))
    per = jnp.where(valid, image_loss / jnp.where(valid, M2, 1.0), 0.0)
    cnt = jnp.sum(valid.astype(jnp.float32))
    return jnp.where(jnp.any(valid), jnp.sum(per) / jnp.where(cnt > 0, cnt, 1.0),
                     jnp.float32(0.0))


if __name__ == "__main__":
    key = jax.random.PRNGKey(0)
    k1, k2, k3 = jax.random.split(key, 3)

    # Small (B, H, W) depth-map shapes; one full-image block per step.
    B, H, W = 2, 16, 16
    prediction = jax.random.normal(k1, (B, H, W), dtype=jnp.float32)
    target = jax.random.normal(k2, (B, H, W), dtype=jnp.float32)
    mask = (jax.random.uniform(k3, (B, H, W)) > 0.3).astype(jnp.float32)

    for red in ("batch-based", "image-based"):
        out = jax.block_until_ready(
            mse_loss_pallas(prediction, target, mask, reduction=red))
        ref = _mse_loss_ref(prediction, target, mask, reduction=red)
        assert jnp.allclose(out, ref, rtol=1e-5, atol=1e-6), (red, out, ref)

    # Odd spatial dims (H not multiple of 8, W < 128) + one fully-invalid image.
    B2, H2, W2 = 2, 37, 53
    kk1, kk2, kk3 = jax.random.split(jax.random.PRNGKey(1), 3)
    p2 = jax.random.normal(kk1, (B2, H2, W2), dtype=jnp.float32)
    t2 = jax.random.normal(kk2, (B2, H2, W2), dtype=jnp.float32)
    m2 = (jax.random.uniform(kk3, (B2, H2, W2)) > 0.5).astype(jnp.float32)
    m2 = m2.at[1].set(0.0)  # one image fully invalid
    for red in ("batch-based", "image-based"):
        out = jax.block_until_ready(mse_loss_pallas(p2, t2, m2, reduction=red))
        ref = _mse_loss_ref(p2, t2, m2, reduction=red)
        assert jnp.allclose(out, ref, rtol=1e-5, atol=1e-6), (red, out, ref)

    # Force the multi-block path at small shapes (tiny per-block byte budget):
    # exercises in-kernel ragged-tail masking AND the 2-way parallel H split.
    B3, H3, W3 = 2, 60, 53
    kk1, kk2, kk3 = jax.random.split(jax.random.PRNGKey(2), 3)
    p3 = jax.random.normal(kk1, (B3, H3, W3), dtype=jnp.float32)
    t3 = jax.random.normal(kk2, (B3, H3, W3), dtype=jnp.float32)
    m3 = (jax.random.uniform(kk3, (B3, H3, W3)) > 0.4).astype(jnp.float32)
    for red in ("batch-based", "image-based"):
        out = jax.block_until_ready(
            mse_loss_pallas(p3, t3, m3, reduction=red,
                            target_block_bytes=8 * W3 * 4))
        ref = _mse_loss_ref(p3, t3, m3, reduction=red)
        assert jnp.allclose(out, ref, rtol=1e-5, atol=1e-6), (red, out, ref)

    print("KERNEL_OK")
</pallas_src>

<mosaic_0001>
module attributes {stable_mosaic.version = 11 : i64} {
  func.func @kernel(%arg0: i32, %arg1: i32, %arg2: i32, %arg3: memref<1x16x16xf32, #tpu.memory_space<vmem>>, %arg4: memref<1x16x16xf32, #tpu.memory_space<vmem>>, %arg5: memref<1x16x16xf32, #tpu.memory_space<vmem>>, %arg6: memref<1x1x1x16xf32, #tpu.memory_space<vmem>>, %arg7: memref<1x1x1x16xf32, #tpu.memory_space<vmem>>) attributes {dimension_semantics = [#tpu.dimension_semantics<parallel>, #tpu.dimension_semantics<parallel>, #tpu.dimension_semantics<arbitrary>], iteration_bounds = array<i64: 2, 1, 1>, scalar_prefetch = 0 : i64, scratch_operands = 0 : i64, tpu.core_type = #tpu.core_type<tc>, window_params = [{transform_indices = @transform_0, window_bounds = array<i64: 1, 16, 16>}, {transform_indices = @transform_1, window_bounds = array<i64: 1, 16, 16>}, {transform_indices = @transform_2, window_bounds = array<i64: 1, 16, 16>}, {transform_indices = @transform_3, window_bounds = array<i64: 1, 1, 1, 16>}, {transform_indices = @transform_4, window_bounds = array<i64: 1, 1, 1, 16>}]} {
    %c0_i32 = arith.constant 0 : i32
    %0 = arith.cmpi eq, %arg2, %c0_i32 : i32
    %1 = arith.extui %0 : i1 to i32
    %c0_i32_0 = arith.constant 0 : i32
    %2 = arith.cmpi ne, %1, %c0_i32_0 : i32
    scf.if %2 {
      %cst_26 = arith.constant 0.000000e+00 : f32
      %24 = vector.broadcast %cst_26 : f32 to vector<1x1x1x16xf32>
      %c0_27 = arith.constant 0 : index
      %c0_28 = arith.constant 0 : index
      %c0_29 = arith.constant 0 : index
      %c0_30 = arith.constant 0 : index
      %25 = vector.load %arg6[%c0_27, %c0_28, %c0_29, %c0_30] : memref<1x1x1x16xf32, #tpu.memory_space<vmem>>, vector<1x1x1x16xf32>
      tpu.vector_store %arg6[%c0_27, %c0_28, %c0_29, %c0_30], %24 {strides = array<i32>} : memref<1x1x1x16xf32, #tpu.memory_space<vmem>>, vector<1x1x1x16xf32>,
      %cst_31 = arith.constant 0.000000e+00 : f32
      %26 = vector.broadcast %cst_31 : f32 to vector<1x1x1x16xf32>
      %c0_32 = arith.constant 0 : index
      %c0_33 = arith.constant 0 : index
      %c0_34 = arith.constant 0 : index
      %c0_35 = arith.constant 0 : index
      %27 = vector.load %arg7[%c0_32, %c0_33, %c0_34, %c0_35] : memref<1x1x1x16xf32, #tpu.memory_space<vmem>>, vector<1x1x1x16xf32>
      tpu.vector_store %arg7[%c0_32, %c0_33, %c0_34, %c0_35], %26 {strides = array<i32>} : memref<1x1x1x16xf32, #tpu.memory_space<vmem>>, vector<1x1x1x16xf32>,
    } else {
    }
    %c0 = arith.constant 0 : index
    %c0_1 = arith.constant 0 : index
    %c0_2 = arith.constant 0 : index
    %3 = vector.load %arg3[%c0, %c0_1, %c0_2] : memref<1x16x16xf32, #tpu.memory_space<vmem>>, vector<1x16x16xf32>
    %4 = vector.shape_cast %3 : vector<1x16x16xf32> to vector<16x16xf32>
    %c0_3 = arith.constant 0 : index
    %c0_4 = arith.constant 0 : index
    %c0_5 = arith.constant 0 : index
    %5 = vector.load %arg4[%c0_3, %c0_4, %c0_5] : memref<1x16x16xf32, #tpu.memory_space<vmem>>, vector<1x16x16xf32>
    %6 = vector.shape_cast %5 : vector<1x16x16xf32> to vector<16x16xf32>
    %c0_6 = arith.constant 0 : index
    %c0_7 = arith.constant 0 : index
    %c0_8 = arith.constant 0 : index
    %7 = vector.load %arg5[%c0_6, %c0_7, %c0_8] : memref<1x16x16xf32, #tpu.memory_space<vmem>>, vector<1x16x16xf32>
    %8 = vector.shape_cast %7 : vector<1x16x16xf32> to vector<16x16xf32>
    %9 = arith.subf %4, %6 : vector<16x16xf32>
    %10 = arith.mulf %8, %9 : vector<16x16xf32>
    %11 = arith.mulf %10, %9 : vector<16x16xf32>
    %cst = arith.constant dense<0.000000e+00> : vector<16xf32>
    %12 = vector.multi_reduction <add>, %11, %cst [0] : vector<16x16xf32> to vector<16xf32>
    %13 = vector.shape_cast %12 : vector<16xf32> to vector<1x16xf32>
    %cst_9 = arith.constant dense<0.000000e+00> : vector<16xf32>
    %14 = vector.multi_reduction <add>, %8, %cst_9 [0] : vector<16x16xf32> to vector<16xf32>
    %15 = vector.shape_cast %14 : vector<16xf32> to vector<1x16xf32>
    %c0_10 = arith.constant 0 : index
    %c0_11 = arith.constant 0 : index
    %c0_12 = arith.constant 0 : index
    %c0_13 = arith.constant 0 : index
    %16 = vector.load %arg6[%c0_10, %c0_11, %c0_12, %c0_13] : memref<1x1x1x16xf32, #tpu.memory_space<vmem>>, vector<1x1x1x16xf32>
    %17 = vector.shape_cast %13 : vector<1x16xf32> to vector<1x1x1x16xf32>
    %18 = arith.addf %16, %17 : vector<1x1x1x16xf32>
    %c0_14 = arith.constant 0 : index
    %c0_15 = arith.constant 0 : index
    %c0_16 = arith.constant 0 : index
    %c0_17 = arith.constant 0 : index
    %19 = vector.load %arg6[%c0_14, %c0_15, %c0_16, %c0_17] : memref<1x1x1x16xf32, #tpu.memory_space<vmem>>, vector<1x1x1x16xf32>
    tpu.vector_store %arg6[%c0_14, %c0_15, %c0_16, %c0_17], %18 {strides = array<i32>} : memref<1x1x1x16xf32, #tpu.memory_space<vmem>>, vector<1x1x1x16xf32>,
    %c0_18 = arith.constant 0 : index
    %c0_19 = arith.constant 0 : index
    %c0_20 = arith.constant 0 : index
    %c0_21 = arith.constant 0 : index
    %20 = vector.load %arg7[%c0_18, %c0_19, %c0_20, %c0_21] : memref<1x1x1x16xf32, #tpu.memory_space<vmem>>, vector<1x1x1x16xf32>
    %21 = vector.shape_cast %15 : vector<1x16xf32> to vector<1x1x1x16xf32>
    %22 = arith.addf %20, %21 : vector<1x1x1x16xf32>
    %c0_22 = arith.constant 0 : index
    %c0_23 = arith.constant 0 : index
    %c0_24 = arith.constant 0 : index
    %c0_25 = arith.constant 0 : index
    %23 = vector.load %arg7[%c0_22, %c0_23, %c0_24, %c0_25] : memref<1x1x1x16xf32, #tpu.memory_space<vmem>>, vector<1x1x1x16xf32>
    tpu.vector_store %arg7[%c0_22, %c0_23, %c0_24, %c0_25], %22 {strides = array<i32>} : memref<1x1x1x16xf32, #tpu.memory_space<vmem>>, vector<1x1x1x16xf32>,
    return
  }
  func.func @transform_0(%arg0: i32, %arg1: i32, %arg2: i32) -> (i32, i32, i32) {
    %c1_i32 = arith.constant 1 : i32
    %0 = arith.muli %arg1, %c1_i32 : i32
    %1 = arith.addi %0, %arg2 : i32
    %c0_i32 = arith.constant 0 : i32
    %c0_i32_0 = arith.constant 0 : i32
    return %arg0, %1, %c0_i32 : i32, i32, i32
  }
  func.func @transform_1(%arg0: i32, %arg1: i32, %arg2: i32) -> (i32, i32, i32) {
    %c1_i32 = arith.constant 1 : i32
    %0 = arith.muli %arg1, %c1_i32 : i32
    %1 = arith.addi %0, %arg2 : i32
    %c0_i32 = arith.constant 0 : i32
    %c0_i32_0 = arith.constant 0 : i32
    return %arg0, %1, %c0_i32 : i32, i32, i32
  }
  func.func @transform_2(%arg0: i32, %arg1: i32, %arg2: i32) -> (i32, i32, i32) {
    %c1_i32 = arith.constant 1 : i32
    %0 = arith.muli %arg1, %c1_i32 : i32
    %1 = arith.addi %0, %arg2 : i32
    %c0_i32 = arith.constant 0 : i32
    %c0_i32_0 = arith.constant 0 : i32
    return %arg0, %1, %c0_i32 : i32, i32, i32
  }
  func.func @transform_3(%arg0: i32, %arg1: i32, %arg2: i32) -> (i32, i32, i32, i32) {
    %c0_i32 = arith.constant 0 : i32
    %c0_i32_0 = arith.constant 0 : i32
    %c0_i32_1 = arith.constant 0 : i32
    return %arg0, %arg1, %c0_i32, %c0_i32_0 : i32, i32, i32, i32
  }
  func.func @transform_4(%arg0: i32, %arg1: i32, %arg2: i32) -> (i32, i32, i32, i32) {
    %c0_i32 = arith.constant 0 : i32
    %c0_i32_0 = arith.constant 0 : i32
    %c0_i32_1 = arith.constant 0 : i32
    return %arg0, %arg1, %c0_i32, %c0_i32_0 : i32, i32, i32, i32
  }
}

</mosaic_0001>

<llo_original>
// kernel: mse_loss_pallas.1
$region0: #{mse_loss_pallas.1}
  #allocation0 [shape = 'u32[]', space=smem, size = 0x4, offset = 0x4, fixed_abs, tag = 'smem constant byte address 0x4 - core index']
  #allocation1 [shape = 'u32[72,128]{1,0:T(1,128)}', space=vmem, size = 0x9000, scoped, tag = 'internal scratch']
  %s0 = inlined_call_operand.hbm [shape: f32[2,16,16], index: 0, kind: input, shape index: {}]
  %s1 = inlined_call_operand.hbm [shape: f32[2,16,16], index: 1, kind: input, shape index: {}]
  %s2 = inlined_call_operand.hbm [shape: f32[2,16,16], index: 2, kind: input, shape index: {}]
  %s3 = inlined_call_operand.vmem [shape: f32[2,1,1,16], index: 3, kind: output, shape index: {0}]
  %s4 = inlined_call_operand.vmem [shape: f32[2,1,1,16], index: 4, kind: output, shape index: {1}]
  %5 = xla_tuple %s3, %s4
  %s6 = sld [smem:[#allocation0]]
  $region69: #{mse_loss_pallas.1} parent=0
    _
  %s8 = ssub.s32 1, %s6
  %s9 = scalar_select 0, %s8, %s6
  $region1: #{mse_loss_pallas.1} parent=0
    #allocation2 [shape = 'u8[16384]{0}', space=vmem, size = 0x4000, scoped, tag = 'input window, operand 0']
    #allocation3 [shape = 's32[2]{0}', space=sflag, size = 0x8, scoped, tag = 'scoped memory for mse_loss_pallas.1']
    #allocation4 [shape = 'u8[16384]{0}', space=vmem, size = 0x4000, scoped, tag = 'input window, operand 1']
    #allocation5 [shape = 's32[2]{0}', space=sflag, size = 0x8, scoped, tag = 'scoped memory for mse_loss_pallas.1']
    #allocation6 [shape = 'u8[16384]{0}', space=vmem, size = 0x4000, scoped, tag = 'input window, operand 2']
    %10 = vsyncpa [#allocation3], 0
    %s11 = scalar_lea.sflag [#allocation3], 1
    %12 = vsyncpa %s11, 0
    %13 = vsyncpa [#allocation5], 0
    %s14 = scalar_lea.sflag [#allocation5], 1
    %15 = vsyncpa %s14, 0
    loop: start=0, step=1, limit=4
    $region2: #{mse_loss_pallas.1} parent=1 // loop_pre_header
      _
    $region3: #{mse_loss_pallas.1} parent=1 // loop_header
      %s17 = sphi 0, %s21
      %p18 = scmp.ge.s32.totalorder %s17, 4
      %s24 = sphi 0, %s43
      %s25 = sphi 0, %s39
      %s26 = sphi 0, %s35
      %s27 = sphi 0, %s24
      %s28 = sphi 0, %s25
      %s29 = sphi 0, %s26
      %s30 = sphi 0, %s27
      %s31 = sphi 0, %s28
      %s32 = sphi 0, %s29
      %s50 = sphi 0, %s52
      %s53 = sphi 0, %s50
      %s54 = sphi 0, %s53
      %s70 = sphi 0, %s54
      %s80 = sphi 0, %s82
      %s83 = sphi 0, %s80
      %s84 = sphi 0, %s83
      %s100 = sphi 0, %s84
      %s110 = sphi 0, %s112
      %s113 = sphi 0, %s110
      %s114 = sphi 0, %s113
      %s130 = sphi 0, %s114
      %s138 = sphi 0, %s140
      %s141 = sphi 0, %s138
      %s142 = sphi 0, %s141
      %s158 = sphi 0, %s142
      %s166 = sphi 0, %s168
      %s169 = sphi 0, %s166
      %s170 = sphi 0, %s169
      %s186 = sphi 0, %s170
    $region4: #{mse_loss_pallas.1} parent=1 // loop_header_branch
      %20 = sbr.rel (%p18) target = $region8
    $region5: #{mse_loss_pallas.1} parent=1 // loop_body
      %s22 = ssub.s32 %s17, 1
      %s23 = ssub.s32 %s17, 2
      %s33 = sadd.s32 1, %s26
      %p34 = scmp.ge.s32.totalorder %s33, 1
      %s35 = scalar_select %p34, 0, %s33
      %s36 = sadd.s32 1, %s25
      %s37 = scalar_select %p34, %s36, %s25
      %p38 = scmp.ge.s32.totalorder %s37, 1
      %s39 = scalar_select %p38, 0, %s37
      %s40 = sadd.s32 1, %s24
      %s41 = scalar_select %p38, %s40, %s24
      %p42 = scmp.ge.s32.totalorder %s41, 2
      %s43 = scalar_select %p42, 0, %s41
      %s44 = sadd.s32 %s25, %s26
      %s45 = sadd.s32 %s39, %s35
      %s46 = ssub.s32 %s24, %s43
      %s47 = ssub.s32 %s44, %s45
      %s48 = sor.u32 %s46, %s47
      %p49 = scmp.eq.s32.totalorder %s48, 0
      %s51 = sadd.s32 %s50, 1
      %s52 = scalar_select %p49, %s50, %s51
      %p55 = pneg %p49
      %p56 = scmp.eq.s32.totalorder %s17, 1
      %p57 = por %p55, %p56
      %p58 = scmp.ne.s32.totalorder %s50, %s53
      %p59 = scmp.eq.s32.totalorder %s17, 0
      %p60 = por %p58, %p59
      %p61 = scmp.ne.s32.totalorder %s50, %s53
      %p62 = scmp.eq.s32.totalorder %s22, 1
      %p63 = por %p61, %p62
      %p64 = scmp.ne.s32.totalorder %s53, %s54
      %p65 = scmp.eq.s32.totalorder %s22, 0
      %p66 = por %p64, %p65
      %p67 = scmp.ne.s32.totalorder %s53, %s54
      %p68 = scmp.eq.s32.totalorder %s23, 1
      %p69 = por %p67, %p68
      %p71 = scmp.ne.s32.totalorder %s54, %s70
      %p72 = scmp.eq.s32.totalorder %s23, 0
      %p73 = por %p71, %p72
      %s74 = sadd.s32 %s25, %s26
      %s75 = sadd.s32 %s39, %s35
      %s76 = ssub.s32 %s24, %s43
      %s77 = ssub.s32 %s74, %s75
      %s78 = sor.u32 %s76, %s77
      %p79 = scmp.eq.s32.totalorder %s78, 0
      %s81 = sadd.s32 %s80, 1
      %s82 = scalar_select %p79, %s80, %s81
      %p85 = pneg %p79
      %p86 = scmp.eq.s32.totalorder %s17, 1
      %p87 = por %p85, %p86
      %p88 = scmp.ne.s32.totalorder %s80, %s83
      %p89 = scmp.eq.s32.totalorder %s17, 0
      %p90 = por %p88, %p89
      %p91 = scmp.ne.s32.totalorder %s80, %s83
      %p92 = scmp.eq.s32.totalorder %s22, 1
      %p93 = por %p91, %p92
      %p94 = scmp.ne.s32.totalorder %s83, %s84
      %p95 = scmp.eq.s32.totalorder %s22, 0
      %p96 = por %p94, %p95
      %p97 = scmp.ne.s32.totalorder %s83, %s84
      %p98 = scmp.eq.s32.totalorder %s23, 1
      %p99 = por %p97, %p98
      %p101 = scmp.ne.s32.totalorder %s84, %s100
      %p102 = scmp.eq.s32.totalorder %s23, 0
      %p103 = por %p101, %p102
      %s104 = sadd.s32 %s25, %s26
      %s105 = sadd.s32 %s39, %s35
      %s106 = ssub.s32 %s24, %s43
      %s107 = ssub.s32 %s104, %s105
      %s108 = sor.u32 %s106, %s107
      %p109 = scmp.eq.s32.totalorder %s108, 0
      %s111 = sadd.s32 %s110, 1
      %s112 = scalar_select %p109, %s110, %s111
      %p115 = pneg %p109
      %p116 = scmp.eq.s32.totalorder %s17, 1
      %p117 = por %p115, %p116
      %p118 = scmp.ne.s32.totalorder %s110, %s113
      %p119 = scmp.eq.s32.totalorder %s17, 0
      %p120 = por %p118, %p119
      %p121 = scmp.ne.s32.totalorder %s110, %s113
      %p122 = scmp.eq.s32.totalorder %s22, 1
      %p123 = por %p121, %p122
      %p124 = scmp.ne.s32.totalorder %s113, %s114
      %p125 = scmp.eq.s32.totalorder %s22, 0
      %p126 = por %p124, %p125
      %p127 = scmp.ne.s32.totalorder %s113, %s114
      %p128 = scmp.eq.s32.totalorder %s23, 1
      %p129 = por %p127, %p128
      %p131 = scmp.ne.s32.totalorder %s114, %s130
      %p132 = scmp.eq.s32.totalorder %s23, 0
      %p133 = por %p131, %p132
      %s134 = ssub.s32 %s24, %s43
      %s135 = ssub.s32 %s25, %s39
      %s136 = sor.u32 %s134, %s135
      %p137 = scmp.eq.s32.totalorder %s136, 0
      %s139 = sadd.s32 %s138, 1
      %s140 = scalar_select %p137, %s138, %s139
      %p143 = pneg %p137
      %p144 = scmp.eq.s32.totalorder %s17, 1
      %p145 = por %p143, %p144
      %p146 = scmp.ne.s32.totalorder %s138, %s141
      %p147 = scmp.eq.s32.totalorder %s17, 0
      %p148 = por %p146, %p147
      %p149 = scmp.ne.s32.totalorder %s138, %s141
      %p150 = scmp.eq.s32.totalorder %s22, 1
      %p151 = por %p149, %p150
      %p152 = scmp.ne.s32.totalorder %s141, %s142
      %p153 = scmp.eq.s32.totalorder %s22, 0
      %p154 = por %p152, %p153
      %p155 = scmp.ne.s32.totalorder %s141, %s142
      %p156 = scmp.eq.s32.totalorder %s23, 1
      %p157 = por %p155, %p156
      %p159 = scmp.ne.s32.totalorder %s142, %s158
      %p160 = scmp.eq.s32.totalorder %s23, 0
      %p161 = por %p159, %p160
      %s162 = ssub.s32 %s24, %s43
      %s163 = ssub.s32 %s25, %s39
      %s164 = sor.u32 %s162, %s163
      %p165 = scmp.eq.s32.totalorder %s164, 0
      %s167 = sadd.s32 %s166, 1
      %s168 = scalar_select %p165, %s166, %s167
      %p171 = pneg %p165
      %p172 = scmp.eq.s32.totalorder %s17, 1
      %p173 = por %p171, %p172
      %p174 = scmp.ne.s32.totalorder %s166, %s169
      %p175 = scmp.eq.s32.totalorder %s17, 0
      %p176 = por %p174, %p175
      %p177 = scmp.ne.s32.totalorder %s166, %s169
      %p178 = scmp.eq.s32.totalorder %s22, 1
      %p179 = por %p177, %p178
      %p180 = scmp.ne.s32.totalorder %s169, %s170
      %p181 = scmp.eq.s32.totalorder %s22, 0
      %p182 = por %p180, %p181
      %p183 = scmp.ne.s32.totalorder %s169, %s170
      %p184 = scmp.eq.s32.totalorder %s23, 1
      %p185 = por %p183, %p184
      %p187 = scmp.ne.s32.totalorder %s170, %s186
      %p188 = scmp.eq.s32.totalorder %s23, 0
      %p189 = por %p187, %p188
      %p190 = scmp.le.s32.totalorder 1, %s17
      %p191 = scmp.lt.s32.totalorder %s17, 3
      %p192 = pnand %p190, %p191
      %p193 = pneg %p192
      // Predicated region
      $region9: #{mse_loss_pallas.1} parent=5 // pred_check
        _
      $region10: #{mse_loss_pallas.1} parent=5 // pred_check_branch
        %195 = sbr.rel (%p192) target = $region12
      $region11: #{mse_loss_pallas.1} parent=5 // pred_region
        %s196 = ssub.s32 %s17, 1
      $region12: #{mse_loss_pallas.1} parent=5 // pred_fallthru
        _
      %p197 = scmp.lt.s32.totalorder %s17, 2
      // Predicated region
      $region13: #{mse_loss_pallas.1} parent=5 // pred_check
        %p198 = pneg %p197
      $region14: #{mse_loss_pallas.1} parent=5 // pred_check_branch
        %200 = sbr.rel (%p198) target = $region16
      $region15: #{mse_loss_pallas.1} parent=5 // pred_region
        // Predicated region
        $region17: #{mse_loss_pallas.1} parent=15 // pred_check
          %p201 = pneg %p60
        $region18: #{mse_loss_pallas.1} parent=15 // pred_check_branch
          %203 = sbr.rel (%p201) target = $region20
        $region19: #{mse_loss_pallas.1} parent=15 // pred_region
          %s204 = sand.u32 %s50, 1
          %s205 = scalar_lea.sflag [#allocation3], %s204
          %s206 = sand.u32 %s50, 1
          %s207 = smul.addr %s206, 16
          %s208 = scalar_lea.vmem [#allocation2], %s207
          %s209 = sadd.s32 %s25, %s26
          %s210 = smul.u32 2, %s209
          %212 = vsyncadd %s205, 0
          %s213 = smul.addr %s24, 2
          %s214 = sadd.s32 %s210, %s213
          %s215 = smul.addr %s214, 8
          %s216 = scalar_lea.hbm %s0, %s215
          %s217 = sshll.u32 %s216, 4
          %s218 = int_to_ptr.hbm [resolvable:$true] %s217
          %s219 = sshll.u32 %s208, 4
          %s220 = int_to_ptr.vmem [resolvable:$true] %s219
          %225 = dma.hbm_to_vmem [thread:$0]  %s218, 256, %s220, %s205, 128, 128, 8
        $region20: #{mse_loss_pallas.1} parent=15 // pred_fallthru
          _
        // Predicated region
        $region21: #{mse_loss_pallas.1} parent=15 // pred_check
          %p226 = pneg %p90
        $region22: #{mse_loss_pallas.1} parent=15 // pred_check_branch
          %228 = sbr.rel (%p226) target = $region24
        $region23: #{mse_loss_pallas.1} parent=15 // pred_region
          %s229 = sand.u32 %s17, 1
          %s230 = scalar_lea.sflag [#allocation5], %s229
          %s231 = sand.u32 %s80, 1
          %s232 = smul.addr %s231, 16
          %s233 = scalar_lea.vmem [#allocation4], %s232
          %s234 = sadd.s32 %s25, %s26
          %s235 = smul.u32 2, %s234
          %237 = vsyncadd %s230, 0
          %s238 = smul.addr %s24, 2
          %s239 = sadd.s32 %s235, %s238
          %s240 = smul.addr %s239, 8
          %s241 = scalar_lea.hbm %s1, %s240
          %s242 = sshll.u32 %s241, 4
          %s243 = int_to_ptr.hbm [resolvable:$true] %s242
          %s244 = sshll.u32 %s233, 4
          %s245 = int_to_ptr.vmem [resolvable:$true] %s244
          %250 = dma.hbm_to_vmem [thread:$0]  %s243, 256, %s245, %s230, 128, 128, 8
        $region24: #{mse_loss_pallas.1} parent=15 // pred_fallthru
          _
        // Predicated region
        $region25: #{mse_loss_pallas.1} parent=15 // pred_check
          %p251 = pneg %p120
        $region26: #{mse_loss_pallas.1} parent=15 // pred_check_branch
          %253 = sbr.rel (%p251) target = $region28
        $region27: #{mse_loss_pallas.1} parent=15 // pred_region
          %s254 = sand.u32 %s17, 1
          %s255 = scalar_lea.sflag [#allocation5], %s254
          %s256 = sand.u32 %s110, 1
          %s257 = smul.addr %s256, 16
          %s258 = scalar_lea.vmem [#allocation6], %s257
          %s259 = sadd.s32 %s25, %s26
          %s260 = smul.u32 2, %s259
          %262 = vsyncadd %s255, 0
          %s263 = smul.addr %s24, 2
          %s264 = sadd.s32 %s260, %s263
          %s265 = smul.addr %s264, 8
          %s266 = scalar_lea.hbm %s2, %s265
          %s267 = sshll.u32 %s266, 4
          %s268 = int_to_ptr.hbm [resolvable:$true] %s267
          %s269 = sshll.u32 %s258, 4
          %s270 = int_to_ptr.vmem [resolvable:$true] %s269
          %275 = dma.hbm_to_vmem [thread:$0]  %s268, 256, %s270, %s255, 128, 128, 8
        $region28: #{mse_loss_pallas.1} parent=15 // pred_fallthru
          _
      $region16: #{mse_loss_pallas.1} parent=5 // pred_fallthru
        _
      %p276 = scmp.le.s32.totalorder 1, %s17
      %p277 = scmp.lt.s32.totalorder %s17, 3
      %p278 = pnand %p276, %p277
      %p279 = pneg %p278
      // Predicated region
      $region29: #{mse_loss_pallas.1} parent=5 // pred_check
        _
      $region30: #{mse_loss_pallas.1} parent=5 // pred_check_branch
        %281 = sbr.rel (%p278) target = $region32
      $region31: #{mse_loss_pallas.1} parent=5 // pred_region
        %s282 = ssub.s32 %s17, 1
        %s283 = sand.u32 %s53, 1
        %s284 = scalar_lea.sflag [#allocation3], %s283
        %s285 = sand.u32 %s53, 1
        %s286 = smul.addr %s285, 16
        %s287 = scalar_lea.vmem [#allocation2], %s286
        // Predicated region
        $region33: #{mse_loss_pallas.1} parent=31 // pred_check
          %p288 = pneg %p66
        $region34: #{mse_loss_pallas.1} parent=31 // pred_check_branch
          %290 = sbr.rel (%p288) target = $region36
        $region35: #{mse_loss_pallas.1} parent=31 // pred_region
          %292 = dma.done %s284, 256
        $region36: #{mse_loss_pallas.1} parent=31 // pred_fallthru
          _
        %s293 = sand.u32 %s22, 1
        %s294 = scalar_lea.sflag [#allocation5], %s293
        %s295 = sand.u32 %s83, 1
        %s296 = smul.addr %s295, 16
        %s297 = scalar_lea.vmem [#allocation4], %s296
        // Predicated region
        $region37: #{mse_loss_pallas.1} parent=31 // pred_check
          %p298 = pneg %p96
        $region38: #{mse_loss_pallas.1} parent=31 // pred_check_branch
          %300 = sbr.rel (%p298) target = $region40
        $region39: #{mse_loss_pallas.1} parent=31 // pred_region
          %302 = dma.done %s294, 256
        $region40: #{mse_loss_pallas.1} parent=31 // pred_fallthru
          _
        %s303 = sand.u32 %s22, 1
        %s304 = scalar_lea.sflag [#allocation5], %s303
        %s305 = sand.u32 %s113, 1
        %s306 = smul.addr %s305, 16
        %s307 = scalar_lea.vmem [#allocation6], %s306
        // Predicated region
        $region41: #{mse_loss_pallas.1} parent=31 // pred_check
          %p308 = pneg %p126
        $region42: #{mse_loss_pallas.1} parent=31 // pred_check_branch
          %310 = sbr.rel (%p308) target = $region44
        $region43: #{mse_loss_pallas.1} parent=31 // pred_region
          %312 = dma.done %s304, 256
        $region44: #{mse_loss_pallas.1} parent=31 // pred_fallthru
          _
        %s313 = sand.u32 %s53, 1
        %s314 = scalar_lea.sflag [#allocation3], %s313
        %s315 = sand.u32 %s53, 1
        %s316 = smul.addr %s315, 16
        %s317 = scalar_lea.vmem [#allocation2], %s316
        %p318 = pneg %p66
        %p319 = pneg %p63
        %s320 = sand.u32 %s22, 1
        %s321 = scalar_lea.sflag [#allocation5], %s320
        %s322 = sand.u32 %s83, 1
        %s323 = smul.addr %s322, 16
        %s324 = scalar_lea.vmem [#allocation4], %s323
        %p325 = pneg %p96
        %p326 = pneg %p93
        %s327 = sand.u32 %s22, 1
        %s328 = scalar_lea.sflag [#allocation5], %s327
        %s329 = sand.u32 %s113, 1
        %s330 = smul.addr %s329, 16
        %s331 = scalar_lea.vmem [#allocation6], %s330
        %p332 = pneg %p126
        %p333 = pneg %p123
        %p334 = pneg %p154
        %p335 = pneg %p151
        %p336 = scmp.lt.s32.totalorder %s27, 1
        %s337 = scalar_select %p336, %s27, 1
        %p338 = scmp.lt.s32.totalorder %s28, 0
        %s339 = scalar_select %p338, %s28, 0
        %s340 = sadd.s32 %s339, %s337
        %s341 = scalar_lea.vmem %s3, %s340
        %p342 = pneg %p182
        %p343 = pneg %p179
        %p344 = scmp.lt.s32.totalorder %s27, 1
        %s345 = scalar_select %p344, %s27, 1
        %p346 = scmp.lt.s32.totalorder %s28, 0
        %s347 = scalar_select %p346, %s28, 0
        %s348 = sadd.s32 %s347, %s345
        %s349 = scalar_lea.vmem %s4, %s348
        %s350 = sadd.s32 %s28, %s29
        %s351 = smul.u32 2, %s350
        %s352 = sadd.s32 %s28, %s29
        %s353 = smul.u32 2, %s352
        %s354 = sadd.s32 %s28, %s29
        %s355 = smul.u32 2, %s354
        %p356 = scmp.lt.s32.totalorder %s27, 1
        %s357 = scalar_select %p356, %s27, 1
        %p358 = scmp.lt.s32.totalorder %s28, 0
        %s359 = scalar_select %p358, %s28, 0
        %s360 = sadd.s32 %s359, %s357
        %s361 = scalar_lea.vmem %s3, %s360
        %p362 = scmp.lt.s32.totalorder %s27, 1
        %s363 = scalar_select %p362, %s27, 1
        %p364 = scmp.lt.s32.totalorder %s28, 0
        %s365 = scalar_select %p364, %s28, 0
        %s366 = sadd.s32 %s365, %s363
        %s367 = scalar_lea.vmem %s4, %s366
        %p368 = scmp.eq.s32.totalorder %s29, 0
        // Predicated region
        $region45: #{mse_loss_pallas.1} parent=31 // pred_check
          %p369 = pneg %p368
        $region46: #{mse_loss_pallas.1} parent=31 // pred_check_branch
          %371 = sbr.rel (%p369) target = $region48
        $region47: #{mse_loss_pallas.1} parent=31 // pred_region
          %vm372 = vcmask 122880
          %373 = vst.msk [vmem:[%s361] sm:$0x1] %vm372, 0.0
          %374 = vst.msk [vmem:[%s367] sm:$0x1] %vm372, 0.0
        $region48: #{mse_loss_pallas.1} parent=31 // pred_fallthru
          _
        %v375 = vld [vmem:[%s287] sm:$0xff]
        %v376 = vld [vmem:[%s287 + $0x8] sm:$0xff]
        %v377 = vld [vmem:[%s297] sm:$0xff]
        %v378 = vld [vmem:[%s297 + $0x8] sm:$0xff]
        %v379 = vld [vmem:[%s307] sm:$0xff]
        %v380 = vld [vmem:[%s307 + $0x8] sm:$0xff]
        %v381 = vsub.f32 %v375, %v377
        %v382 = vsub.f32 %v376, %v378
        %v383 = vmul.f32 %v379, %v381
        %v384 = vmul.f32 %v380, %v382
        %v385 = vmul.f32 %v383, %v381
        %v386 = vmul.f32 %v384, %v382
        %vm387 = vcmask 130048
        %v388 = vsel %vm387, %v385, 0.0
        %v389 = vsel %vm387, %v386, 0.0
        %v390 = vadd.f32 %v388, %v389
        %v391 = vrot.slane %v390, 4
        %v392 = vadd.f32 %v390, %v391
        %v393 = vrot.slane %v392, 2
        %v394 = vadd.f32 %v392, %v393
        %v395 = vrot.slane %v394, 1
        %v396 = vadd.f32 %v394, %v395
        %v397 = vsel %vm387, %v379, 0.0
        %v398 = vsel %vm387, %v380, 0.0
        %v399 = vadd.f32 %v397, %v398
        %v400 = vrot.slane %v399, 4
        %v401 = vadd.f32 %v399, %v400
        %v402 = vrot.slane %v401, 2
        %v403 = vadd.f32 %v401, %v402
        %v404 = vrot.slane %v403, 1
        %v405 = vadd.f32 %v403, %v404
        %v406 = vld [vmem:[%s361] sm:$0x1]
        %v407 = vadd.f32 %v406, %v396
        %vm408 = vcmask 122880
        %409 = vst.msk [vmem:[%s361] sm:$0x1] %vm408, %v407
        %v410 = vld [vmem:[%s367] sm:$0x1]
        %v411 = vadd.f32 %v410, %v405
        %412 = vst.msk [vmem:[%s367] sm:$0x1] %vm408, %v411
        %p413 = scmp.lt.s32.totalorder %s27, 1
        %s414 = scalar_select %p413, %s27, 1
        %p415 = scmp.lt.s32.totalorder %s28, 0
        %s416 = scalar_select %p415, %s28, 0
        %s417 = sadd.s32 %s416, %s414
        %s418 = scalar_lea.vmem %s3, %s417
        %p419 = scmp.lt.s32.totalorder %s27, 1
        %s420 = scalar_select %p419, %s27, 1
        %p421 = scmp.lt.s32.totalorder %s28, 0
        %s422 = scalar_select %p421, %s28, 0
        %s423 = sadd.s32 %s422, %s420
        %s424 = scalar_lea.vmem %s4, %s423
        // Predicated region
        $region49: #{mse_loss_pallas.1} parent=31 // pred_check
          %p425 = pneg %p151
        $region50: #{mse_loss_pallas.1} parent=31 // pred_check_branch
          %427 = sbr.rel (%p425) target = $region52
        $region51: #{mse_loss_pallas.1} parent=31 // pred_region
          _
        $region52: #{mse_loss_pallas.1} parent=31 // pred_fallthru
          _
        // Predicated region
        $region53: #{mse_loss_pallas.1} parent=31 // pred_check
          %p428 = pneg %p179
        $region54: #{mse_loss_pallas.1} parent=31 // pred_check_branch
          %430 = sbr.rel (%p428) target = $region56
        $region55: #{mse_loss_pallas.1} parent=31 // pred_region
          _
        $region56: #{mse_loss_pallas.1} parent=31 // pred_fallthru
          _
      $region32: #{mse_loss_pallas.1} parent=5 // pred_fallthru
        _
      %p431 = scmp.le.s32.totalorder 2, %s17
      // Predicated region
      $region57: #{mse_loss_pallas.1} parent=5 // pred_check
        %p432 = pneg %p431
      $region58: #{mse_loss_pallas.1} parent=5 // pred_check_branch
        %434 = sbr.rel (%p432) target = $region60
      $region59: #{mse_loss_pallas.1} parent=5 // pred_region
        %s435 = ssub.s32 %s17, 2
        // Predicated region
        $region61: #{mse_loss_pallas.1} parent=59 // pred_check
          %p436 = pneg %p157
        $region62: #{mse_loss_pallas.1} parent=59 // pred_check_branch
          %438 = sbr.rel (%p436) target = $region64
        $region63: #{mse_loss_pallas.1} parent=59 // pred_region
          %p439 = scmp.lt.s32.totalorder %s30, 1
          %s440 = scalar_select %p439, %s30, 1
          %p441 = scmp.lt.s32.totalorder %s31, 0
          %s442 = scalar_select %p441, %s31, 0
          %s443 = sadd.s32 %s442, %s440
          %s444 = scalar_lea.vmem %s3, %s443
        $region64: #{mse_loss_pallas.1} parent=59 // pred_fallthru
          _
        // Predicated region
        $region65: #{mse_loss_pallas.1} parent=59 // pred_check
          %p445 = pneg %p185
        $region66: #{mse_loss_pallas.1} parent=59 // pred_check_branch
          %447 = sbr.rel (%p445) target = $region68
        $region67: #{mse_loss_pallas.1} parent=59 // pred_region
          %p448 = scmp.lt.s32.totalorder %s30, 1
          %s449 = scalar_select %p448, %s30, 1
          %p450 = scmp.lt.s32.totalorder %s31, 0
          %s451 = scalar_select %p450, %s31, 0
          %s452 = sadd.s32 %s451, %s449
          %s453 = scalar_lea.vmem %s4, %s452
        $region68: #{mse_loss_pallas.1} parent=59 // pred_fallthru
          _
      $region60: #{mse_loss_pallas.1} parent=5 // pred_fallthru
        _
    $region6: #{mse_loss_pallas.1} parent=1 // loop_footer
      %s21 = sadd.s32 1, %s17
    $region7: #{mse_loss_pallas.1} parent=1 // loop_footer_branch
      %16 = sbr.rel target = $region3
    $region8: #{mse_loss_pallas.1} parent=1 // loop_exit
      _
    %454 = vsyncpa [#allocation3], 1
    %s455 = scalar_lea.sflag [#allocation3], 1
    %456 = vsyncpa %s455, 1
    %457 = vsyncpa [#allocation5], 1
    %s458 = scalar_lea.sflag [#allocation5], 1
    %459 = vsyncpa %s458, 1

</llo_original>
